<compile_context>
chip_gen: v7x
topology: tpu7x:2x2x1
jax: 0.10.0
libtpu: 0.0.40
codegen_flags: <defaults>
</compile_context>

<pallas_src>
import functools

import jax
import jax.numpy as jnp
from jax.experimental import pallas as pl
from jax.experimental.pallas import tpu as pltpu


def _round_up(x, m):
    return ((x + m - 1) // m) * m


def _feat_bottleneck_kernel(x_ref, w_ref, p_ref, o_ref, *,
                            apply_bn: bool, eps: float, tk: int, n_k: int,
                            x_resident: bool):
    """One (m, n) output tile; K ('arbitrary') is the innermost grid axis.

    x_ref : (tm, F_pad) if x_resident else (tm, tk)
    w_ref : (tk, tn)       weight tile (stored as torch_weight.T)
    p_ref : (1, tn) [bias]          if not BN
            (2, tn) [gamma; beta]   if BN (linear bias cancelled by mean-sub)
    o_ref : (tm, tn) f32  -- doubles as the K accumulator (no extra scratch)
    """
    k = pl.program_id(2)

    if x_resident and n_k > 1:
        x = x_ref[:, pl.ds(pl.multiple_of(k * tk, tk), tk)]
    else:
        x = x_ref[...]
    part = jnp.dot(x, w_ref[...], preferred_element_type=jnp.float32)

    def _epilogue(y):
        if apply_bn:
            # Training-mode BatchNorm1d: biased variance over the batch axis.
            # Linear bias is skipped (mean subtraction cancels it exactly).
            mean = jnp.mean(y, axis=0, keepdims=True)
            d = y - mean
            var = jnp.mean(d * d, axis=0, keepdims=True)
            y = d * jax.lax.rsqrt(var + eps)
            y = y * p_ref[0:1, :] + p_ref[1:2, :]          # gamma, beta
        else:
            y = y + p_ref[0:1, :]                          # bias
        return y

    if n_k == 1:
        o_ref[...] = _epilogue(part)
    else:
        @pl.when(k == 0)
        def _():
            o_ref[...] = jnp.zeros_like(o_ref)

        o_ref[...] += part

        @pl.when(k == n_k - 1)
        def _():
            o_ref[...] = _epilogue(o_ref[...])


def feat_bottleneck_forward(x, w, b, gamma=None, beta=None, *, btype="ori",
                            eps=1e-5, compute_dtype=None,
                            tm=None, tn=None, tk=None):
    """x: (B, F); w: (F, D) = torch_weight.T; b/gamma/beta: (D,). Returns (B, D) f32."""
    B, F = x.shape
    F2, D = w.shape
    assert F == F2
    apply_bn = (btype == "bn")

    # Optional reduced-precision streaming of x / W (f32 MXU accumulation kept).
    if compute_dtype is not None:
        x = x.astype(compute_dtype)
        w = w.astype(compute_dtype)
    isz = jnp.dtype(x.dtype).itemsize

    # ----- generation-aware VMEM budget (v5e/v6e: 128 MiB, v7x: 64 MiB) -----
    try:
        vmem_cap = int(pltpu.get_tpu_info().vmem_capacity_bytes)
    except Exception:
        vmem_cap = 0
    if vmem_cap <= 0:
        vmem_cap = 64 << 20          # conservative fallback (v7x physical VMEM)
    budget = int(vmem_cap * 0.85)

    # ---------------- N (output column) padding & tile ----------------------
    D_pad = max(_round_up(D, 128), 128)          # lane-dense, unmasked stores
    if tn is None:
        tn = 512 if D_pad % 512 == 0 else (256 if D_pad % 256 == 0 else 128)

    # ---------------------------- M (batch) tiling --------------------------
    if apply_bn:
        # Exact batch statistics require the whole batch resident in one tile.
        tm_ = B
        B_pad = B
    else:
        tm_ = tm if tm is not None else (B if B <= 256 else 256)
        B_pad = _round_up(B, tm_)
    m_tiles = B_pad // tm_

    # Keep both v7x TensorCores busy: ensure >= 2 parallel tiles when possible.
    if m_tiles * (D_pad // tn) < 2 and tn > 128 and D_pad // 128 >= 2:
        tn = 128
    n_tiles = D_pad // tn

    # ----------------------- K tiling & x residency -------------------------
    n_rows = 2 if apply_bn else 1
    fixed = 2 * tm_ * tn * 4 + 2 * n_rows * tn * 4   # f32 out tiles + params
    if tk is not None:
        tk_ = tk
        F_pad = _round_up(F, tk_)
        x_resident = (2 * tm_ * F_pad * isz) <= budget // 3
    else:
        single_pass = 2 * tm_ * F * isz + 2 * F * tn * isz + fixed
        if single_pass <= budget:
            tk_, F_pad, x_resident = F, F, True      # one contraction pass
        else:
            # x stays resident (one HBM read per M tile) if its slab is cheap;
            # otherwise stream (tm, tk) x tiles along K.
            x_resident = (2 * tm_ * _round_up(F, 128) * isz) <= budget // 3
            per_k = 2 * tn * isz + (0 if x_resident else 2 * tm_ * isz)
            avail = budget - fixed - (2 * tm_ * _round_up(F, 128) * isz
                                      if x_resident else 0)
            tk_ = 128
            for cand in (2048, 1024, 512, 256):
                if cand * per_k <= avail:
                    tk_ = cand
                    break
            F_pad = _round_up(F, tk_)
    n_k = F_pad // tk_

    # --------------------------- VMEM footprint -----------------------------
    x_bytes = 2 * tm_ * (F_pad if x_resident else tk_) * isz
    vmem_bytes = (x_bytes
                  + 2 * tk_ * tn * isz        # double-buffered weight tiles
                  + 2 * n_rows * tn * 4       # packed params
                  + 2 * tm_ * tn * 4)         # f32 output tiles (= accumulator)
    assert vmem_bytes <= int(vmem_cap * 0.9), (
        f"tile footprint {vmem_bytes >> 20} MiB exceeds the VMEM budget "
        f"({vmem_cap >> 20} MiB physical); reduce batch (BN mode) or tiles")
    vmem_limit = max(vmem_bytes + (4 << 20), 32 << 20)
    vmem_limit = int(min(vmem_limit, vmem_cap - (4 << 20)))
    vmem_limit = int(max(vmem_limit, vmem_bytes + (2 << 20)))

    # ---------------------- padding & packed params -------------------------
    xw, ww = x, w
    if F_pad != F:
        xw = jnp.pad(xw, ((0, 0), (0, F_pad - F)))
        ww = jnp.pad(ww, ((0, F_pad - F), (0, 0)))
    if B_pad != B:
        xw = jnp.pad(xw, ((0, B_pad - B), (0, 0)))
    if D_pad != D:
        ww = jnp.pad(ww, ((0, 0), (0, D_pad - D)))

    if apply_bn:
        params = jnp.stack([gamma, beta], axis=0).astype(jnp.float32)   # (2, D)
    else:
        params = b.reshape(1, D).astype(jnp.float32)                    # (1, D)
    if D_pad != D:
        params = jnp.pad(params, ((0, 0), (0, D_pad - D)))

    kernel = functools.partial(_feat_bottleneck_kernel, apply_bn=apply_bn,
                               eps=eps, tk=tk_, n_k=n_k, x_resident=x_resident)

    if x_resident:
        # Block index independent of j and k -> x DMA'd from HBM once per M tile.
        x_spec = pl.BlockSpec((tm_, F_pad), lambda i, j, k: (i, 0))
    else:
        x_spec = pl.BlockSpec((tm_, tk_), lambda i, j, k: (i, k))

    out = pl.pallas_call(
        kernel,
        out_shape=jax.ShapeDtypeStruct((B_pad, D_pad), jnp.float32),
        grid_spec=pltpu.PrefetchScalarGridSpec(
            num_scalar_prefetch=0,
            grid=(m_tiles, n_tiles, n_k),                       # K innermost
            in_specs=[
                x_spec,
                pl.BlockSpec((tk_, tn), lambda i, j, k: (k, j)),     # W tile
                pl.BlockSpec((n_rows, tn), lambda i, j, k: (0, j)),  # params
            ],
            out_specs=pl.BlockSpec((tm_, tn), lambda i, j, k: (i, j)),
        ),
        compiler_params=pltpu.CompilerParams(
            dimension_semantics=("parallel", "parallel", "arbitrary"),
            vmem_limit_bytes=vmem_limit,
        ),
    )(xw, ww, params)

    if B_pad != B or D_pad != D:
        out = out[:B, :D]
    return out


def _reference(x, w, b, gamma, beta, btype, eps=1e-5):
    y = x @ w + b
    if btype == "bn":
        mean = jnp.mean(y, axis=0, keepdims=True)
        var = jnp.mean((y - mean) ** 2, axis=0, keepdims=True)
        y = (y - mean) / jnp.sqrt(var + eps) * gamma + beta
    return y


def _make_inputs(key, B, F, D):
    kx, kw, kb = jax.random.split(key, 3)
    x = jax.random.normal(kx, (B, F), dtype=jnp.float32)
    bound = 1.0 / (F ** 0.5)
    w = jax.random.uniform(kw, (F, D), minval=-bound, maxval=bound,
                           dtype=jnp.float32)
    b = jax.random.uniform(kb, (D,), minval=-bound, maxval=bound,
                           dtype=jnp.float32)
    gamma = jnp.ones((D,), dtype=jnp.float32) * 1.25
    beta = jnp.full((D,), 0.1, dtype=jnp.float32)
    return x, w, b, gamma, beta


if __name__ == "__main__":
    key = jax.random.PRNGKey(0)
    ok = True

    # (B, feature_dim, bottleneck_dim, explicit tk override)
    configs = [
        (8, 32, 256, None),     # module-default shapes, single K pass
        (10, 48, 200, None),    # unaligned B / F / D -> padding path
        (8, 256, 256, 128),     # forced multi-K accumulation path
    ]

    for (B, F, D, tk_override) in configs:
        key, sub = jax.random.split(key)
        x, w, b, gamma, beta = _make_inputs(sub, B, F, D)
        for btype in ("ori", "bn"):
            out = feat_bottleneck_forward(x, w, b, gamma, beta,
                                          btype=btype, tk=tk_override)
            out = jax.block_until_ready(out)
            ref = _reference(x, w, b, gamma, beta, btype)
            if out.shape != (B, D):
                ok = False
            if not jnp.allclose(out, ref, atol=1e-4, rtol=1e-4):
                ok = False

    if ok:
        print("KERNEL_OK")
</pallas_src>

<mosaic_0001>
module attributes {stable_mosaic.version = 11 : i64} {
  func.func @_feat_bottleneck_kernel(%arg0: i32, %arg1: i32, %arg2: i32, %arg3: memref<8x32xf32, #tpu.memory_space<vmem>>, %arg4: memref<32x128xf32, #tpu.memory_space<vmem>>, %arg5: memref<1x128xf32, #tpu.memory_space<vmem>>, %arg6: memref<8x128xf32, #tpu.memory_space<vmem>>) attributes {dimension_semantics = [#tpu.dimension_semantics<parallel>, #tpu.dimension_semantics<parallel>, #tpu.dimension_semantics<arbitrary>], iteration_bounds = array<i64: 1, 2, 1>, scalar_prefetch = 0 : i64, scratch_operands = 0 : i64, tpu.core_type = #tpu.core_type<tc>, window_params = [{transform_indices = @transform_0, window_bounds = array<i64: 8, 32>}, {transform_indices = @transform_1, window_bounds = array<i64: 32, 128>}, {transform_indices = @transform_2, window_bounds = array<i64: 1, 128>}, {transform_indices = @transform_3, window_bounds = array<i64: 8, 128>}]} {
    %c0 = arith.constant 0 : index
    %c0_0 = arith.constant 0 : index
    %0 = vector.load %arg3[%c0, %c0_0] : memref<8x32xf32, #tpu.memory_space<vmem>>, vector<8x32xf32>
    %c0_1 = arith.constant 0 : index
    %c0_2 = arith.constant 0 : index
    %1 = vector.load %arg4[%c0_1, %c0_2] : memref<32x128xf32, #tpu.memory_space<vmem>>, vector<32x128xf32>
    %cst = arith.constant dense<0.000000e+00> : vector<8x128xf32>
    %2 = tpu.matmul %0, %1, %cst {dimension_numbers = #tpu.dot_dimension_numbers<[1], [0], [0], [1], [0, 0, 1, 1], [], []>} : vector<8x32xf32>, vector<32x128xf32>, vector<8x128xf32> -> vector<8x128xf32>
    %c0_3 = arith.constant 0 : index
    %c0_4 = arith.constant 0 : index
    %3 = vector.load %arg5[%c0_3, %c0_4] : memref<1x128xf32, #tpu.memory_space<vmem>>, vector<1x128xf32>
    %4 = vector.broadcast %3 : vector<1x128xf32> to vector<8x128xf32>
    %5 = arith.addf %2, %4 : vector<8x128xf32>
    %c0_5 = arith.constant 0 : index
    %c0_6 = arith.constant 0 : index
    %6 = vector.load %arg6[%c0_5, %c0_6] : memref<8x128xf32, #tpu.memory_space<vmem>>, vector<8x128xf32>
    tpu.vector_store %arg6[%c0_5, %c0_6], %5 {strides = array<i32>} : memref<8x128xf32, #tpu.memory_space<vmem>>, vector<8x128xf32>,
    return
  }
  func.func @transform_0(%arg0: i32, %arg1: i32, %arg2: i32) -> (i32, i32) {
    %c0_i32 = arith.constant 0 : i32
    %c0_i32_0 = arith.constant 0 : i32
    return %arg0, %c0_i32 : i32, i32
  }
  func.func @transform_1(%arg0: i32, %arg1: i32, %arg2: i32) -> (i32, i32) {
    %c0_i32 = arith.constant 0 : i32
    return %arg2, %arg1 : i32, i32
  }
  func.func @transform_2(%arg0: i32, %arg1: i32, %arg2: i32) -> (i32, i32) {
    %c0_i32 = arith.constant 0 : i32
    %c0_i32_0 = arith.constant 0 : i32
    return %c0_i32, %arg1 : i32, i32
  }
  func.func @transform_3(%arg0: i32, %arg1: i32, %arg2: i32) -> (i32, i32) {
    %c0_i32 = arith.constant 0 : i32
    return %arg0, %arg1 : i32, i32
  }
}

</mosaic_0001>

<llo_original>
// kernel: tpu_custom_call.1
$region0: #{tpu_custom_call.1}
  #allocation0 [shape = 'u32[]', space=smem, size = 0x4, offset = 0x4, fixed_abs, tag = 'smem constant byte address 0x4 - core index']
  #allocation1 [shape = 'u32[144,128]{1,0:T(1,128)}', space=vmem, size = 0x12000, scoped, tag = 'internal scratch']
  %s0 = inlined_call_operand.hbm [shape: f32[8,32], index: 0, kind: input, shape index: {}]
  %s1 = inlined_call_operand.hbm [shape: f32[32,256], index: 1, kind: input, shape index: {}]
  %s2 = inlined_call_operand.vmem [shape: f32[1,256], index: 2, kind: input, shape index: {}]
  %s3 = inlined_call_operand.hbm [shape: f32[8,256], index: 3, kind: output, shape index: {}]
  %s4 = sld [smem:[#allocation0]]
  $region53: #{tpu_custom_call.1} parent=0
    _
  %s6 = ssub.s32 1, %s4
  %s7 = scalar_select 0, %s6, %s4
  $region1: #{tpu_custom_call.1} parent=0
    #allocation2 [shape = 'u8[4096]{0}', space=vmem, size = 0x1000, scoped, tag = 'input window, operand 0, single buffered']
    #allocation3 [shape = 's32[2]{0}', space=sflag, size = 0x8, scoped, tag = 'scoped memory for tpu_custom_call.1']
    #allocation4 [shape = 's32[2]{0}', space=sflag, size = 0x8, scoped, tag = 'scoped memory for tpu_custom_call.1']
    #allocation5 [shape = 'u8[32768]{0}', space=vmem, size = 0x8000, scoped, tag = 'input window, operand 1']
    #allocation6 [shape = 's32[2]{0}', space=sflag, size = 0x8, scoped, tag = 'scoped memory for tpu_custom_call.1']
    #allocation7 [shape = 'u8[8192]{0}', space=vmem, size = 0x2000, scoped, tag = 'output window, operand 0']
    %8 = vsyncpa [#allocation3], 0
    %9 = vsyncpa [#allocation6], 0
    %s10 = scalar_lea.sflag [#allocation6], 1
    %11 = vsyncpa %s10, 0
    %12 = vsyncpa [#allocation4], 0
    %s13 = scalar_lea.sflag [#allocation4], 1
    %14 = vsyncpa %s13, 0
    loop: start=0, step=1, limit=4
    $region2: #{tpu_custom_call.1} parent=1 // loop_pre_header
      _
    $region3: #{tpu_custom_call.1} parent=1 // loop_header
      %s16 = sphi 0, %s20
      %p17 = scmp.ge.s32.totalorder %s16, 4
      %s23 = sphi 0, %s42
      %s24 = sphi 0, %s38
      %s25 = sphi 0, %s34
      %s26 = sphi 0, %s23
      %s27 = sphi 0, %s24
      %s28 = sphi 0, %s25
      %s29 = sphi 0, %s26
      %s30 = sphi 0, %s27
      %s31 = sphi 0, %s28
      %s45 = sphi 0, %s47
      %s48 = sphi 0, %s45
      %s49 = sphi 0, %s48
      %s65 = sphi 0, %s49
      %s73 = sphi 0, %s75
      %s76 = sphi 0, %s73
      %s77 = sphi 0, %s76
      %s93 = sphi 0, %s77
      %s99 = sphi 0, %s101
      %s102 = sphi 0, %s99
      %s103 = sphi 0, %s102
      %s119 = sphi 0, %s103
      %s127 = sphi 0, %s129
      %s130 = sphi 0, %s127
      %s131 = sphi 0, %s130
      %s147 = sphi 0, %s131
    $region4: #{tpu_custom_call.1} parent=1 // loop_header_branch
      %19 = sbr.rel (%p17) target = $region8
    $region5: #{tpu_custom_call.1} parent=1 // loop_body
      %s21 = ssub.s32 %s16, 1
      %s22 = ssub.s32 %s16, 2
      %s32 = sadd.s32 1, %s25
      %p33 = scmp.ge.s32.totalorder %s32, 1
      %s34 = scalar_select %p33, 0, %s32
      %s35 = sadd.s32 1, %s24
      %s36 = scalar_select %p33, %s35, %s24
      %p37 = scmp.ge.s32.totalorder %s36, 2
      %s38 = scalar_select %p37, 0, %s36
      %s39 = sadd.s32 1, %s23
      %s40 = scalar_select %p37, %s39, %s23
      %p41 = scmp.ge.s32.totalorder %s40, 1
      %s42 = scalar_select %p41, 0, %s40
      %s43 = ssub.s32 %s23, %s42
      %p44 = scmp.eq.s32.totalorder %s43, 0
      %s46 = sadd.s32 %s45, 1
      %s47 = scalar_select %p44, %s45, %s46
      %p50 = pneg %p44
      %p51 = scmp.eq.s32.totalorder %s16, 1
      %p52 = por %p50, %p51
      %p53 = scmp.ne.s32.totalorder %s45, %s48
      %p54 = scmp.eq.s32.totalorder %s16, 0
      %p55 = por %p53, %p54
      %p56 = scmp.ne.s32.totalorder %s45, %s48
      %p57 = scmp.eq.s32.totalorder %s21, 1
      %p58 = por %p56, %p57
      %p59 = scmp.ne.s32.totalorder %s48, %s49
      %p60 = scmp.eq.s32.totalorder %s21, 0
      %p61 = por %p59, %p60
      %p62 = scmp.ne.s32.totalorder %s48, %s49
      %p63 = scmp.eq.s32.totalorder %s22, 1
      %p64 = por %p62, %p63
      %p66 = scmp.ne.s32.totalorder %s49, %s65
      %p67 = scmp.eq.s32.totalorder %s22, 0
      %p68 = por %p66, %p67
      %s69 = ssub.s32 %s25, %s34
      %s70 = ssub.s32 %s24, %s38
      %s71 = sor.u32 %s69, %s70
      %p72 = scmp.eq.s32.totalorder %s71, 0
      %s74 = sadd.s32 %s73, 1
      %s75 = scalar_select %p72, %s73, %s74
      %p78 = pneg %p72
      %p79 = scmp.eq.s32.totalorder %s16, 1
      %p80 = por %p78, %p79
      %p81 = scmp.ne.s32.totalorder %s73, %s76
      %p82 = scmp.eq.s32.totalorder %s16, 0
      %p83 = por %p81, %p82
      %p84 = scmp.ne.s32.totalorder %s73, %s76
      %p85 = scmp.eq.s32.totalorder %s21, 1
      %p86 = por %p84, %p85
      %p87 = scmp.ne.s32.totalorder %s76, %s77
      %p88 = scmp.eq.s32.totalorder %s21, 0
      %p89 = por %p87, %p88
      %p90 = scmp.ne.s32.totalorder %s76, %s77
      %p91 = scmp.eq.s32.totalorder %s22, 1
      %p92 = por %p90, %p91
      %p94 = scmp.ne.s32.totalorder %s77, %s93
      %p95 = scmp.eq.s32.totalorder %s22, 0
      %p96 = por %p94, %p95
      %s97 = ssub.s32 %s24, %s38
      %p98 = scmp.eq.s32.totalorder %s97, 0
      %s100 = sadd.s32 %s99, 1
      %s101 = scalar_select %p98, %s99, %s100
      %p104 = pneg %p98
      %p105 = scmp.eq.s32.totalorder %s16, 1
      %p106 = por %p104, %p105
      %p107 = scmp.ne.s32.totalorder %s99, %s102
      %p108 = scmp.eq.s32.totalorder %s16, 0
      %p109 = por %p107, %p108
      %p110 = scmp.ne.s32.totalorder %s99, %s102
      %p111 = scmp.eq.s32.totalorder %s21, 1
      %p112 = por %p110, %p111
      %p113 = scmp.ne.s32.totalorder %s102, %s103
      %p114 = scmp.eq.s32.totalorder %s21, 0
      %p115 = por %p113, %p114
      %p116 = scmp.ne.s32.totalorder %s102, %s103
      %p117 = scmp.eq.s32.totalorder %s22, 1
      %p118 = por %p116, %p117
      %p120 = scmp.ne.s32.totalorder %s103, %s119
      %p121 = scmp.eq.s32.totalorder %s22, 0
      %p122 = por %p120, %p121
      %s123 = ssub.s32 %s23, %s42
      %s124 = ssub.s32 %s24, %s38
      %s125 = sor.u32 %s123, %s124
      %p126 = scmp.eq.s32.totalorder %s125, 0
      %s128 = sadd.s32 %s127, 1
      %s129 = scalar_select %p126, %s127, %s128
      %p132 = pneg %p126
      %p133 = scmp.eq.s32.totalorder %s16, 1
      %p134 = por %p132, %p133
      %p135 = scmp.ne.s32.totalorder %s127, %s130
      %p136 = scmp.eq.s32.totalorder %s16, 0
      %p137 = por %p135, %p136
      %p138 = scmp.ne.s32.totalorder %s127, %s130
      %p139 = scmp.eq.s32.totalorder %s21, 1
      %p140 = por %p138, %p139
      %p141 = scmp.ne.s32.totalorder %s130, %s131
      %p142 = scmp.eq.s32.totalorder %s21, 0
      %p143 = por %p141, %p142
      %p144 = scmp.ne.s32.totalorder %s130, %s131
      %p145 = scmp.eq.s32.totalorder %s22, 1
      %p146 = por %p144, %p145
      %p148 = scmp.ne.s32.totalorder %s131, %s147
      %p149 = scmp.eq.s32.totalorder %s22, 0
      %p150 = por %p148, %p149
      %p151 = scmp.le.s32.totalorder 1, %s16
      %p152 = scmp.lt.s32.totalorder %s16, 3
      %p153 = pnand %p151, %p152
      %p154 = pneg %p153
      // Predicated region
      $region9: #{tpu_custom_call.1} parent=5 // pred_check
        _
      $region10: #{tpu_custom_call.1} parent=5 // pred_check_branch
        %156 = sbr.rel (%p153) target = $region12
      $region11: #{tpu_custom_call.1} parent=5 // pred_region
        %s157 = ssub.s32 %s16, 1
        // Predicated region
        $region13: #{tpu_custom_call.1} parent=11 // pred_check
          %p158 = pneg %p61
        $region14: #{tpu_custom_call.1} parent=11 // pred_check_branch
          %160 = sbr.rel (%p158) target = $region16
        $region15: #{tpu_custom_call.1} parent=11 // pred_region
          %s162 = ssub.s32 128, 128
          %163 = vsyncadd [#allocation3], %s162
          %s164 = smul.addr %s26, 128
          %s165 = scalar_lea.hbm %s0, %s164
          %s167 = sshll.u32 [#allocation2], 4
          %s168 = int_to_ptr.vmem [resolvable:$true] %s167
          %170 = dma.hbm_to_vmem [thread:$0]  %s165, 128, %s168, [#allocation3]
        $region16: #{tpu_custom_call.1} parent=11 // pred_fallthru
          _
      $region12: #{tpu_custom_call.1} parent=5 // pred_fallthru
        _
      %p171 = scmp.lt.s32.totalorder %s16, 2
      // Predicated region
      $region17: #{tpu_custom_call.1} parent=5 // pred_check
        %p172 = pneg %p171
      $region18: #{tpu_custom_call.1} parent=5 // pred_check_branch
        %174 = sbr.rel (%p172) target = $region20
      $region19: #{tpu_custom_call.1} parent=5 // pred_region
        // Predicated region
        $region21: #{tpu_custom_call.1} parent=19 // pred_check
          %p175 = pneg %p83
        $region22: #{tpu_custom_call.1} parent=19 // pred_check_branch
          %177 = sbr.rel (%p175) target = $region24
        $region23: #{tpu_custom_call.1} parent=19 // pred_region
          %s178 = sand.u32 %s73, 1
          %s179 = scalar_lea.sflag [#allocation6], %s178
          %s180 = sand.u32 %s73, 1
          %s181 = smul.addr %s180, 32
          %s182 = scalar_lea.vmem [#allocation5], %s181
          %s183 = smul.u32 4, %s25
          %s185 = ssub.s32 512, 512
          %186 = vsyncadd %s179, %s185
          %s187 = smul.addr %s183, 2
          %s188 = sadd.s32 %s24, %s187
          %s189 = smul.addr %s188, 128
          %s190 = scalar_lea.hbm %s1, %s189
          %s191 = sshll.u32 %s182, 4
          %s192 = int_to_ptr.vmem [resolvable:$true] %s191
          %197 = dma.hbm_to_vmem [thread:$0]  %s190, 512, %s192, %s179, 256, 128, 8
        $region24: #{tpu_custom_call.1} parent=19 // pred_fallthru
          _
        // Predicated region
        $region25: #{tpu_custom_call.1} parent=19 // pred_check
          %p198 = pneg %p109
        $region26: #{tpu_custom_call.1} parent=19 // pred_check_branch
          %200 = sbr.rel (%p198) target = $region28
        $region27: #{tpu_custom_call.1} parent=19 // pred_region
          %p201 = scmp.lt.s32.totalorder %s24, 1
          %s202 = scalar_select %p201, %s24, 1
          %s203 = scalar_lea.vmem %s2, %s202
        $region28: #{tpu_custom_call.1} parent=19 // pred_fallthru
          _
      $region20: #{tpu_custom_call.1} parent=5 // pred_fallthru
        _
      %p204 = scmp.le.s32.totalorder 1, %s16
      %p205 = scmp.lt.s32.totalorder %s16, 3
      %p206 = pnand %p204, %p205
      %p207 = pneg %p206
      // Predicated region
      $region29: #{tpu_custom_call.1} parent=5 // pred_check
        _
      $region30: #{tpu_custom_call.1} parent=5 // pred_check_branch
        %209 = sbr.rel (%p206) target = $region32
      $region31: #{tpu_custom_call.1} parent=5 // pred_region
        %s210 = ssub.s32 %s16, 1
        // Predicated region
        $region33: #{tpu_custom_call.1} parent=31 // pred_check
          %p211 = pneg %p61
        $region34: #{tpu_custom_call.1} parent=31 // pred_check_branch
          %213 = sbr.rel (%p211) target = $region36
        $region35: #{tpu_custom_call.1} parent=31 // pred_region
          %214 = dma.done [#allocation3], 128
        $region36: #{tpu_custom_call.1} parent=31 // pred_fallthru
          _
        %s215 = sand.u32 %s76, 1
        %s216 = scalar_lea.sflag [#allocation6], %s215
        %s217 = sand.u32 %s76, 1
        %s218 = smul.addr %s217, 32
        %s219 = scalar_lea.vmem [#allocation5], %s218
        // Predicated region
        $region37: #{tpu_custom_call.1} parent=31 // pred_check
          %p220 = pneg %p89
        $region38: #{tpu_custom_call.1} parent=31 // pred_check_branch
          %222 = sbr.rel (%p220) target = $region40
        $region39: #{tpu_custom_call.1} parent=31 // pred_region
          %223 = dma.done %s216, 512
        $region40: #{tpu_custom_call.1} parent=31 // pred_fallthru
          _
        %p224 = pneg %p61
        %p225 = pneg %p58
        %s226 = sand.u32 %s76, 1
        %s227 = scalar_lea.sflag [#allocation6], %s226
        %s228 = sand.u32 %s76, 1
        %s229 = smul.addr %s228, 32
        %s230 = scalar_lea.vmem [#allocation5], %s229
        %p231 = pneg %p89
        %p232 = pneg %p86
        %p233 = scmp.lt.s32.totalorder %s27, 1
        %s234 = scalar_select %p233, %s27, 1
        %s235 = scalar_lea.vmem %s2, %s234
        %p236 = pneg %p115
        %p237 = pneg %p112
        %p238 = pneg %p143
        %p239 = pneg %p140
        %s240 = sand.u32 %s130, 1
        %s241 = scalar_lea.sflag [#allocation4], %s240
        %s242 = sand.u32 %s130, 1
        %s243 = smul.addr %s242, 8
        %s244 = scalar_lea.vmem [#allocation7], %s243
        %s245 = smul.u32 4, %s28
        %p246 = scmp.lt.s32.totalorder %s27, 1
        %s247 = scalar_select %p246, %s27, 1
        %s248 = scalar_lea.vmem %s2, %s247
        %v249 = vld [vmem:[#allocation2] sm:$0xff]
        %v250 = vld [vmem:[%s219] sm:$0xff]
        %v251 = vld [vmem:[%s219 + $0x8] sm:$0xff]
        %v252 = vld [vmem:[%s219 + $0x10] sm:$0xff]
        %v253 = vld [vmem:[%s219 + $0x18] sm:$0xff]
        %v254 = vld [vmem:[%s248] sm:$0x1]
        %v256 = vlaneseq
        %v257 = vshrl.u32 %v256, 7
        %v258 = vsub.s32 0, %v257
        %v259 = vrot.slane %v254, %v258
        %vm261 = vcmask 261120
        %v263 = vsel %vm261, %v249, 0
        %265 = vmatprep.subr.mxu0 0.0
        %266 = vmatpush1.msra.mxu0 %v250
        %267 = vmatprep.subr.mxu0 0.0
        %268 = vmatpush1.msra.mxu0 %v251
        %269 = vmatprep.subr.mxu0 0.0
        %270 = vmatpush1.msra.mxu0 %v252
        %271 = vmatprep.subr.mxu0 0.0
        %272 = vmatpush1.msra.mxu0 %v253
        %273 = vmatprep.subr.mxu0 0.0
        %274 = vmatpush1.msra.mxu0 0.0
        %275 = vmatprep.subr.mxu0 0.0
        %276 = vmatpush1.msra.mxu0 0.0
        %277 = vmatprep.subr.mxu0 0.0
        %278 = vmatpush1.msra.mxu0 0.0
        %279 = vmatprep.subr.mxu0 0.0
        %280 = vmatpush1.msra.mxu0 0.0
        %281 = vmatprep.subr.mxu0 0.0
        %282 = vmatpush1.msra.mxu0 0.0
        %283 = vmatprep.subr.mxu0 0.0
        %284 = vmatpush1.msra.mxu0 0.0
        %285 = vmatprep.subr.mxu0 0.0
        %286 = vmatpush1.msra.mxu0 0.0
        %287 = vmatprep.subr.mxu0 0.0
        %288 = vmatpush1.msra.mxu0 0.0
        %289 = vmatprep.subr.mxu0 0.0
        %290 = vmatpush1.msra.mxu0 0.0
        %291 = vmatprep.subr.mxu0 0.0
        %292 = vmatpush1.msra.mxu0 0.0
        %293 = vmatprep.subr.mxu0 0.0
        %294 = vmatpush1.msra.mxu0 0.0
        %295 = vmatprep.subr.mxu0 0.0
        %296 = vmatpush1.msra.mxu0 0.0
        %297 = vmatprep.subr.mxu0 0.0
        %298 = vmatpush1.msra.mxu0 0.0
        %299 = vmatprep.subr.mxu0 0.0
        %300 = vmatpush1.msra.mxu0 0.0
        %301 = vmatprep.subr.mxu0 0.0
        %302 = vmatpush1.msra.mxu0 0.0
        %303 = vmatprep.subr.mxu0 0.0
        %304 = vmatpush1.msra.mxu0 0.0
        %305 = vmatprep.subr.mxu0 0.0
        %306 = vmatpush1.msra.mxu0 0.0
        %307 = vmatprep.subr.mxu0 0.0
        %308 = vmatpush1.msra.mxu0 0.0
        %309 = vmatprep.subr.mxu0 0.0
        %310 = vmatpush1.msra.mxu0 0.0
        %311 = vmatprep.subr.mxu0 0.0
        %312 = vmatpush1.msra.mxu0 0.0
        %313 = vmatprep.subr.mxu0 0.0
        %314 = vmatpush1.msra.mxu0 0.0
        %315 = vmatprep.subr.mxu0 0.0
        %316 = vmatpush1.msra.mxu0 0.0
        %317 = vmatprep.subr.mxu0 0.0
        %318 = vmatpush1.msra.mxu0 0.0
        %319 = vmatprep.subr.mxu0 0.0
        %320 = vmatpush1.msra.mxu0 0.0
        %321 = vmatprep.subr.mxu0 0.0
        %322 = vmatpush1.msra.mxu0 0.0
        %323 = vmatprep.subr.mxu0 0.0
        %324 = vmatpush1.msra.mxu0 0.0
        %325 = vmatprep.subr.mxu0 0.0
        %326 = vmatpush1.msra.mxu0 0.0
        %327 = vmatprep.subr.mxu0 0.0
        %328 = vmatpush1.msra.mxu0 0.0
        %329 = vmatprep.mubr.f32.mxu0 0.0
        %330 = vmatmul.mubr.f32.gmra.mrb[0].mxu0 %v263
        %v331 = vpop.f32.mrb[0].mxu0
        %v332 = vadd.f32 %v259, %v331
        %v333 = vpop.f32.mrb[0].mxu0
        %334 = vdwg.mxu0
        %335 = vst [vmem:[%s244] sm:$0xff] %v332
        %s336 = sand.u32 %s130, 1
        %s337 = scalar_lea.sflag [#allocation4], %s336
        %s338 = sand.u32 %s130, 1
        %s339 = smul.addr %s338, 8
        %s340 = scalar_lea.vmem [#allocation7], %s339
        // Predicated region
        $region41: #{tpu_custom_call.1} parent=31 // pred_check
          %p341 = pneg %p140
        $region42: #{tpu_custom_call.1} parent=31 // pred_check_branch
          %343 = sbr.rel (%p341) target = $region44
        $region43: #{tpu_custom_call.1} parent=31 // pred_region
          %s345 = ssub.s32 128, 128
          %346 = vsyncadd %s337, %s345
          %s347 = smul.addr %s26, 2
          %s348 = sadd.s32 %s27, %s347
          %s349 = smul.addr %s348, 128
          %s350 = scalar_lea.hbm %s3, %s349
          %s352 = sshll.u32 %s340, 4
          %s353 = int_to_ptr.vmem [resolvable:$true] %s352
          %355 = dma.vmem_to_hbm [thread:$0]  %s353, 128, %s350, %s337
        $region44: #{tpu_custom_call.1} parent=31 // pred_fallthru
          _
      $region32: #{tpu_custom_call.1} parent=5 // pred_fallthru
        _
      %p356 = scmp.le.s32.totalorder 2, %s16
      // Predicated region
      $region45: #{tpu_custom_call.1} parent=5 // pred_check
        %p357 = pneg %p356
      $region46: #{tpu_custom_call.1} parent=5 // pred_check_branch
        %359 = sbr.rel (%p357) target = $region48
      $region47: #{tpu_custom_call.1} parent=5 // pred_region
        %s360 = ssub.s32 %s16, 2
        // Predicated region
        $region49: #{tpu_custom_call.1} parent=47 // pred_check
          %p361 = pneg %p146
        $region50: #{tpu_custom_call.1} parent=47 // pred_check_branch
          %363 = sbr.rel (%p361) target = $region52
        $region51: #{tpu_custom_call.1} parent=47 // pred_region
          %s364 = sand.u32 %s131, 1
          %s365 = scalar_lea.sflag [#allocation4], %s364
          %s366 = sand.u32 %s131, 1
          %s367 = smul.addr %s366, 8
          %s368 = scalar_lea.vmem [#allocation7], %s367
          %369 = dma.done %s365, 128
        $region52: #{tpu_custom_call.1} parent=47 // pred_fallthru
          _
      $region48: #{tpu_custom_call.1} parent=5 // pred_fallthru
        _
    $region6: #{tpu_custom_call.1} parent=1 // loop_footer
      %s20 = sadd.s32 1, %s16
    $region7: #{tpu_custom_call.1} parent=1 // loop_footer_branch
      %15 = sbr.rel target = $region3
    $region8: #{tpu_custom_call.1} parent=1 // loop_exit
      _
    %370 = vsyncpa [#allocation3], 1
    %s371 = scalar_lea.sflag [#allocation3], 1
    %372 = vsyncpa %s371, 1
    %373 = vsyncpa [#allocation6], 1
    %s374 = scalar_lea.sflag [#allocation6], 1
    %375 = vsyncpa %s374, 1
    %376 = vsyncpa [#allocation4], 1
    %s377 = scalar_lea.sflag [#allocation4], 1
    %378 = vsyncpa %s377, 1

</llo_original>
